<compile_context>
chip_gen: v7x
topology: tpu7x:2x2x1
jax: 0.10.0
libtpu: 0.0.40
codegen_flags: <defaults>
</compile_context>

<pallas_src>
import functools

import jax
import jax.numpy as jnp
from jax.experimental import pallas as pl
from jax.experimental.pallas import tpu as pltpu


def _channel_linear_kernel(w_ref, b_ref, attns_ref, c_ref, *, lh, c_tile, exact):
    """C[row-tile] = bias + sum_c w[c] * attns[0, c, row-tile, :].

    Refs:
      w_ref:     SMEM (lh,)                f32  -- Linear weight (row of (1, lh))
      b_ref:     SMEM (1,)                 f32  -- Linear bias
      attns_ref: VMEM (c_tile, tile_r, S)  native dtype -- batch-0 channel chunk
      c_ref:     VMEM (tile_r, S)          f32  -- output row tile (revisited over k)
    Grid: (row_tiles ["parallel"], channel_chunks ["arbitrary"]).
    """
    k = pl.program_id(1)

    @pl.when(k == 0)
    def _init():
        # Bias is added exactly once per (i, j) element of C.
        c_ref[...] = jnp.full(c_ref.shape, b_ref[0], dtype=jnp.float32)

    base = k * c_tile

    def body(ci, acc):
        # Upcast after the DMA so bf16 inputs travel at half the bytes.
        return acc + w_ref[base + ci] * attns_ref[ci].astype(jnp.float32)

    zero = jnp.zeros(c_ref.shape, jnp.float32)
    if exact:
        total = jax.lax.fori_loop(0, c_tile, body, zero, unroll=min(c_tile, 4))
    else:
        # Masked tail chunk: only channels < lh are ever read.
        n_valid = jnp.minimum(c_tile, lh - base)
        total = jax.lax.fori_loop(0, n_valid, body, zero)
    c_ref[...] = c_ref[...] + total


def _word_projection_kernel(m_ref, c_ref, mt_ref, out_ref):
    """out = (M @ C) @ M^T -- two tiny MXU matmuls, single grid step."""
    tmp = jnp.dot(m_ref[...], c_ref[...], preferred_element_type=jnp.float32)
    out_ref[...] = jnp.dot(tmp, mt_ref[...], preferred_element_type=jnp.float32)


def attn_encoder_forward(attns, word2subword, coref_w, coref_b, *,
                         c_tile=None, row_tiles=None):
    """attns: (B, L, H, S, S); word2subword: (W, 2) int; coref_w: (1, L*H); coref_b: (1,)."""
    B, L, H, S, S2 = attns.shape
    assert S == S2
    lh = L * H
    W = word2subword.shape[0]

    # Metadata-only reshape (contiguous dim merge); keep the native dtype so
    # the kernel DMAs exactly the stored bytes (no wrapper copy / cast).
    attns_r = attns.reshape(B, lh, S, S)
    itemsize = jnp.dtype(attns_r.dtype).itemsize

    # ---- generation-aware sizing (v5e/v6e: 128 MiB VMEM; v7x: 64 MiB, 2 TCs).
    try:
        vmem_cap = int(pltpu.get_tpu_info().vmem_capacity_bytes)
    except Exception:
        vmem_cap = 64 * 1024 * 1024  # conservative fallback (v7x-sized)
    if vmem_cap >= 100 * 1024 * 1024:   # v5e / v6e
        budget = 16 * 1024 * 1024       # per double-buffered input buffer
        vmem_limit = 100 * 1024 * 1024
        small_vmem_chip = False
    else:                               # v7x
        budget = 7 * 1024 * 1024
        vmem_limit = 52 * 1024 * 1024
        small_vmem_chip = True

    # Parallel row tiling of S (second TensorCore on v7x); off for small S and
    # for 1-TC generations.
    if row_tiles is None:
        row_tiles = 2 if (small_vmem_chip and S >= 256 and S % 16 == 0) else 1
    row_tiles = int(row_tiles)
    assert S % row_tiles == 0
    tile_r = S // row_tiles
    assert tile_r == S or tile_r % 8 == 0

    # Channel chunk: fit the byte budget, cap at 32 channels so the in-kernel
    # loop (and compile size) stays bounded.
    per_ch = tile_r * S * itemsize
    if c_tile is None:
        c_tile = max(1, min(lh, 32, budget // max(per_ch, 1)))
        # Prefer an exact divisor of L*H unless it would shrink the chunk by
        # more than 2x; otherwise keep the bigger chunk and mask the tail.
        best_div = max(d for d in range(1, c_tile + 1) if lh % d == 0)
        if 2 * best_div >= c_tile:
            c_tile = best_div
    c_tile = int(min(max(1, int(c_tile)), lh))
    exact = (lh % c_tile == 0)
    nk = pl.cdiv(lh, c_tile)

    w = coref_w.reshape(lh).astype(jnp.float32)
    b = coref_b.reshape(1).astype(jnp.float32)

    kernel1 = functools.partial(_channel_linear_kernel,
                                lh=lh, c_tile=c_tile, exact=exact)
    cost1 = pl.CostEstimate(
        flops=2 * lh * S * S,
        transcendentals=0,
        bytes_accessed=lh * S * S * itemsize + S * S * 4 + (lh + 1) * 4,
    )

    # ---- kernel 1: subword_coref_attn[0] = Linear(L*H -> 1)(attns[0])  (S, S)
    c = pl.pallas_call(
        kernel1,
        out_shape=jax.ShapeDtypeStruct((S, S), jnp.float32),
        grid=(row_tiles, nk),
        in_specs=[
            pl.BlockSpec(memory_space=pltpu.MemorySpace.SMEM),   # w (lh,)
            pl.BlockSpec(memory_space=pltpu.MemorySpace.SMEM),   # b (1,)
            # Batch pinned to 0 -> only batch-0 bytes move.  Default
            # Buffered(2) double-buffering is intended; do not deepen it.
            pl.BlockSpec((pl.Squeezed(), c_tile, tile_r, S),
                         lambda r, k: (0, k, r, 0)),
        ],
        out_specs=pl.BlockSpec((tile_r, S), lambda r, k: (r, 0)),
        compiler_params=pltpu.CompilerParams(
            dimension_semantics=("parallel", "arbitrary"),
            vmem_limit_bytes=vmem_limit,
        ),
        cost_estimate=cost1,
    )(w, b, attns_r)

    # ---- sub_to_word averaging matrix M, built once in the wrapper (tiny).
    starts = word2subword[:, 0].astype(jnp.int32)
    ends = word2subword[:, 1].astype(jnp.int32)
    idx = jnp.arange(S, dtype=jnp.int32)[None, :]
    mask = ((idx >= starts[:, None]) & (idx < ends[:, None])).astype(jnp.float32)
    # NOTE: empty spans (start == end) give 0/0 -> NaN, matching the PyTorch module.
    m = mask / jnp.sum(mask, axis=1, keepdims=True)          # (W, S)
    mt = m.T                                                 # (S, W)

    cost2 = pl.CostEstimate(
        flops=2 * W * S * S + 2 * W * W * S,
        transcendentals=0,
        bytes_accessed=(2 * W * S + S * S + W * W) * 4,
    )

    # ---- kernel 2: word_coref_attn[0] = M @ C @ M^T  (W, W)
    return pl.pallas_call(
        _word_projection_kernel,
        out_shape=jax.ShapeDtypeStruct((W, W), jnp.float32),
        cost_estimate=cost2,
    )(m, c, mt)


def reference_forward(attns, word2subword, coref_w, coref_b):
    """Pure-JAX transcription of the PyTorch forward (for verification)."""
    s = attns.shape
    a = attns.reshape(s[0], s[1] * s[2], s[3], s[4])
    a = jnp.transpose(a, (0, 2, 3, 1))                        # (B, S, S, L*H)
    sub = jnp.squeeze(a.astype(jnp.float32) @ coref_w.T + coref_b, axis=-1)  # (B, S, S)
    starts = word2subword[:, 0]
    ends = word2subword[:, 1]
    idx = jnp.arange(s[4])[None, :]
    mask = ((idx >= starts[:, None]) & (idx < ends[:, None])).astype(jnp.float32)
    m = mask / jnp.sum(mask, axis=1, keepdims=True)
    word = jnp.matmul(m, sub)                                 # (B, W, S)
    word = jnp.matmul(word, m.T)                              # (B, W, W)
    return word[0]


if __name__ == "__main__":
    key = jax.random.PRNGKey(0)
    B, L, H, S = 2, 2, 4, 16          # batch, num_layers, num_heads, n_subtokens
    n_words = 8
    lh = L * H

    k1, k2, k3 = jax.random.split(key, 3)
    attns = jax.random.uniform(k1, (B, L, H, S, S), dtype=jnp.float32)

    # word boundaries (start, end) over the 16 subtokens, variable word lengths
    word2subword = jnp.array(
        [[0, 1], [1, 3], [3, 4], [4, 7], [7, 9], [9, 12], [12, 14], [14, 16]],
        dtype=jnp.int32,
    )

    # Deterministic Linear(L*H -> 1) params (PyTorch-style uniform fan-in init)
    bound = 1.0 / (lh ** 0.5)
    coref_w = jax.random.uniform(k2, (1, lh), minval=-bound, maxval=bound,
                                 dtype=jnp.float32)
    coref_b = jax.random.uniform(k3, (1,), minval=-bound, maxval=bound,
                                 dtype=jnp.float32)

    # c_tile=2 -> 4 pipelined channel chunks, exercising init/accumulate/finalize.
    out = jax.block_until_ready(
        attn_encoder_forward(attns, word2subword, coref_w, coref_b, c_tile=2)
    )
    ref = reference_forward(attns, word2subword, coref_w, coref_b)

    assert out.shape == (n_words, n_words)
    assert jnp.allclose(out, ref, atol=1e-4, rtol=1e-4), "kernel/reference mismatch"
    print("KERNEL_OK")
</pallas_src>

<mosaic_0001>
module attributes {stable_mosaic.version = 11 : i64} {
  func.func @_channel_linear_kernel(%arg0: i32, %arg1: i32, %arg2: memref<8xf32, #tpu.memory_space<smem>>, %arg3: memref<1xf32, #tpu.memory_space<smem>>, %arg4: memref<1x2x16x16xf32, #tpu.memory_space<vmem>>, %arg5: memref<16x16xf32, #tpu.memory_space<vmem>>) attributes {dimension_semantics = [#tpu.dimension_semantics<parallel>, #tpu.dimension_semantics<arbitrary>], iteration_bounds = array<i64: 1, 4>, scalar_prefetch = 0 : i64, scratch_operands = 0 : i64, tpu.core_type = #tpu.core_type<tc>, window_params = [{transform_indices = @transform_0, window_bounds = array<i64: 8>}, {transform_indices = @transform_1, window_bounds = array<i64: 1>}, {transform_indices = @transform_2, window_bounds = array<i64: 1, 2, 16, 16>}, {transform_indices = @transform_3, window_bounds = array<i64: 16, 16>}]} {
    %c0_i32 = arith.constant 0 : i32
    %0 = arith.cmpi eq, %arg1, %c0_i32 : i32
    %1 = arith.extui %0 : i1 to i32
    %c0_i32_0 = arith.constant 0 : i32
    %2 = arith.cmpi ne, %1, %c0_i32_0 : i32
    scf.if %2 {
      %c0_12 = arith.constant 0 : index
      %26 = memref.load %arg3[%c0_12] : memref<1xf32, #tpu.memory_space<smem>>
      %27 = vector.broadcast %26 : f32 to vector<16x16xf32>
      %c0_13 = arith.constant 0 : index
      %c0_14 = arith.constant 0 : index
      %28 = vector.load %arg5[%c0_13, %c0_14] : memref<16x16xf32, #tpu.memory_space<vmem>>, vector<16x16xf32>
      tpu.vector_store %arg5[%c0_13, %c0_14], %27 {strides = array<i32>} : memref<16x16xf32, #tpu.memory_space<vmem>>, vector<16x16xf32>,
    } else {
    }
    %c2_i32 = arith.constant 2 : i32
    %3 = arith.muli %arg1, %c2_i32 : i32
    %cst = arith.constant 0.000000e+00 : f32
    %4 = vector.broadcast %cst : f32 to vector<16x16xf32>
    %c0_i32_1 = arith.constant 0 : i32
    %5 = arith.addi %3, %c0_i32_1 : i32
    %6 = arith.index_cast %5 : i32 to index
    %7 = memref.load %arg2[%6] : memref<8xf32, #tpu.memory_space<smem>>
    %c0 = arith.constant 0 : index
    %8 = arith.index_cast %c0_i32_1 : i32 to index
    %c0_2 = arith.constant 0 : index
    %c0_3 = arith.constant 0 : index
    %9 = vector.load %arg4[%c0, %8, %c0_2, %c0_3] : memref<1x2x16x16xf32, #tpu.memory_space<vmem>>, vector<1x1x16x16xf32>
    %10 = vector.shape_cast %9 : vector<1x1x16x16xf32> to vector<16x16xf32>
    %11 = vector.broadcast %7 : f32 to vector<16x16xf32>
    %12 = arith.mulf %11, %10 : vector<16x16xf32>
    %13 = arith.addf %4, %12 : vector<16x16xf32>
    %c1_i32 = arith.constant 1 : i32
    %14 = arith.addi %3, %c1_i32 : i32
    %15 = arith.index_cast %14 : i32 to index
    %16 = memref.load %arg2[%15] : memref<8xf32, #tpu.memory_space<smem>>
    %c0_4 = arith.constant 0 : index
    %17 = arith.index_cast %c1_i32 : i32 to index
    %c0_5 = arith.constant 0 : index
    %c0_6 = arith.constant 0 : index
    %18 = vector.load %arg4[%c0_4, %17, %c0_5, %c0_6] : memref<1x2x16x16xf32, #tpu.memory_space<vmem>>, vector<1x1x16x16xf32>
    %19 = vector.shape_cast %18 : vector<1x1x16x16xf32> to vector<16x16xf32>
    %20 = vector.broadcast %16 : f32 to vector<16x16xf32>
    %21 = arith.mulf %20, %19 : vector<16x16xf32>
    %22 = arith.addf %13, %21 : vector<16x16xf32>
    %c2_i32_7 = arith.constant 2 : i32
    %c0_8 = arith.constant 0 : index
    %c0_9 = arith.constant 0 : index
    %23 = vector.load %arg5[%c0_8, %c0_9] : memref<16x16xf32, #tpu.memory_space<vmem>>, vector<16x16xf32>
    %24 = arith.addf %23, %22 : vector<16x16xf32>
    %c0_10 = arith.constant 0 : index
    %c0_11 = arith.constant 0 : index
    %25 = vector.load %arg5[%c0_10, %c0_11] : memref<16x16xf32, #tpu.memory_space<vmem>>, vector<16x16xf32>
    tpu.vector_store %arg5[%c0_10, %c0_11], %24 {strides = array<i32>} : memref<16x16xf32, #tpu.memory_space<vmem>>, vector<16x16xf32>,
    return
  }
  func.func @transform_0(%arg0: i32, %arg1: i32) -> i32 {
    %c0_i32 = arith.constant 0 : i32
    %c0_i32_0 = arith.constant 0 : i32
    return %c0_i32 : i32
  }
  func.func @transform_1(%arg0: i32, %arg1: i32) -> i32 {
    %c0_i32 = arith.constant 0 : i32
    %c0_i32_0 = arith.constant 0 : i32
    return %c0_i32 : i32
  }
  func.func @transform_2(%arg0: i32, %arg1: i32) -> (i32, i32, i32, i32) {
    %c0_i32 = arith.constant 0 : i32
    %c0_i32_0 = arith.constant 0 : i32
    %c0_i32_1 = arith.constant 0 : i32
    return %c0_i32, %arg1, %arg0, %c0_i32_0 : i32, i32, i32, i32
  }
  func.func @transform_3(%arg0: i32, %arg1: i32) -> (i32, i32) {
    %c0_i32 = arith.constant 0 : i32
    %c0_i32_0 = arith.constant 0 : i32
    return %arg0, %c0_i32 : i32, i32
  }
}

</mosaic_0001>

<llo_original>
// kernel: tpu_custom_call.1
$region0: #{tpu_custom_call.1}
  #allocation0 [shape = 'u32[]', space=smem, size = 0x4, offset = 0x4, fixed_abs, tag = 'smem constant byte address 0x4 - core index']
  #allocation1 [shape = 'u32[144,128]{1,0:T(1,128)}', space=vmem, size = 0x12000, scoped, tag = 'internal scratch']
  #allocation2 [shape = 'f32[1]{0:T(128)S(6)}', space=smem, size = 0x200, scoped, tag = 'scoped memory for tpu_custom_call.1']
  %s0 = inlined_call_operand.vmem [shape: f32[8], index: 0, kind: input, shape index: {}]
  %s1 = inlined_call_operand.<no memory space> [shape: f32[1], index: 1, kind: input, shape index: {}]
  %s2 = inlined_call_operand.hbm [shape: f32[2,8,16,16], index: 2, kind: input, shape index: {}]
  %s3 = inlined_call_operand.hbm [shape: f32[16,16], index: 3, kind: output, shape index: {}]
  %s4 = sld [smem:[#allocation0]]
  $region57: #{tpu_custom_call.1} parent=0
    _
  %s6 = ssub.s32 1, %s4
  %s7 = scalar_select 0, %s6, %s4
  %8 = sst [smem:[#allocation2]] %s1
  $region1: #{tpu_custom_call.1} parent=0
    #allocation3 [shape = 'u8[512]{0}', space=smem, size = 0x200, scoped, tag = 'input window, operand 0, single buffered']
    #allocation4 [shape = 's32[2]{0}', space=sflag, size = 0x8, scoped, tag = 'scoped memory for tpu_custom_call.1']
    #allocation5 [shape = 's32[2]{0}', space=sflag, size = 0x8, scoped, tag = 'scoped memory for tpu_custom_call.1']
    #allocation6 [shape = 's32[2]{0}', space=sflag, size = 0x8, scoped, tag = 'scoped memory for tpu_custom_call.1']
    #allocation7 [shape = 'u8[32768]{0}', space=vmem, size = 0x8000, scoped, tag = 'input window, operand 2']
    #allocation8 [shape = 'u8[8192]{0}', space=vmem, size = 0x2000, scoped, tag = 'output window, operand 0, single buffered']
    %9 = vsyncpa [#allocation6], 0
    %10 = vsyncpa [#allocation4], 0
    %s11 = scalar_lea.sflag [#allocation4], 1
    %12 = vsyncpa %s11, 0
    %13 = vsyncpa [#allocation5], 0
    loop: start=0, step=1, limit=6
    $region2: #{tpu_custom_call.1} parent=1 // loop_pre_header
      _
    $region3: #{tpu_custom_call.1} parent=1 // loop_header
      %s15 = sphi 0, %s19
      %p16 = scmp.ge.s32.totalorder %s15, 6
      %s22 = sphi 0, %s34
      %s23 = sphi 0, %s30
      %s24 = sphi 0, %s22
      %s25 = sphi 0, %s23
      %s26 = sphi 0, %s24
      %s27 = sphi 0, %s25
      %s35 = sphi 0, %s35
      %s37 = sphi 0, %s35
      %s38 = sphi 0, %s37
      %s52 = sphi 0, %s38
      %s56 = sphi 0, %s56
      %s58 = sphi 0, %s56
      %s59 = sphi 0, %s58
      %s73 = sphi 0, %s59
      %s81 = sphi 0, %s83
      %s84 = sphi 0, %s81
      %s85 = sphi 0, %s84
      %s101 = sphi 0, %s85
      %s107 = sphi 0, %s109
      %s110 = sphi 0, %s107
      %s111 = sphi 0, %s110
      %s127 = sphi 0, %s111
    $region4: #{tpu_custom_call.1} parent=1 // loop_header_branch
      %18 = sbr.rel (%p16) target = $region8
    $region5: #{tpu_custom_call.1} parent=1 // loop_body
      %s20 = ssub.s32 %s15, 1
      %s21 = ssub.s32 %s15, 2
      %s28 = sadd.s32 1, %s23
      %p29 = scmp.ge.s32.totalorder %s28, 4
      %s30 = scalar_select %p29, 0, %s28
      %s31 = sadd.s32 1, %s22
      %s32 = scalar_select %p29, %s31, %s22
      %p33 = scmp.ge.s32.totalorder %s32, 1
      %s34 = scalar_select %p33, 0, %s32
      %s36 = sadd.s32 %s35, 1
      %p39 = scmp.eq.s32.totalorder %s15, 3
      %p40 = scmp.ne.s32.totalorder %s35, %s37
      %p41 = scmp.eq.s32.totalorder %s15, 0
      %p42 = por %p40, %p41
      %p43 = scmp.ne.s32.totalorder %s35, %s37
      %p44 = scmp.eq.s32.totalorder %s20, 3
      %p45 = por %p43, %p44
      %p46 = scmp.ne.s32.totalorder %s37, %s38
      %p47 = scmp.eq.s32.totalorder %s20, 0
      %p48 = por %p46, %p47
      %p49 = scmp.ne.s32.totalorder %s37, %s38
      %p50 = scmp.eq.s32.totalorder %s21, 3
      %p51 = por %p49, %p50
      %p53 = scmp.ne.s32.totalorder %s38, %s52
      %p54 = scmp.eq.s32.totalorder %s21, 0
      %p55 = por %p53, %p54
      %s57 = sadd.s32 %s56, 1
      %p60 = scmp.eq.s32.totalorder %s15, 3
      %p61 = scmp.ne.s32.totalorder %s56, %s58
      %p62 = scmp.eq.s32.totalorder %s15, 0
      %p63 = por %p61, %p62
      %p64 = scmp.ne.s32.totalorder %s56, %s58
      %p65 = scmp.eq.s32.totalorder %s20, 3
      %p66 = por %p64, %p65
      %p67 = scmp.ne.s32.totalorder %s58, %s59
      %p68 = scmp.eq.s32.totalorder %s20, 0
      %p69 = por %p67, %p68
      %p70 = scmp.ne.s32.totalorder %s58, %s59
      %p71 = scmp.eq.s32.totalorder %s21, 3
      %p72 = por %p70, %p71
      %p74 = scmp.ne.s32.totalorder %s59, %s73
      %p75 = scmp.eq.s32.totalorder %s21, 0
      %p76 = por %p74, %p75
      %s77 = ssub.s32 %s23, %s30
      %s78 = ssub.s32 %s22, %s34
      %s79 = sor.u32 %s77, %s78
      %p80 = scmp.eq.s32.totalorder %s79, 0
      %s82 = sadd.s32 %s81, 1
      %s83 = scalar_select %p80, %s81, %s82
      %p86 = pneg %p80
      %p87 = scmp.eq.s32.totalorder %s15, 3
      %p88 = por %p86, %p87
      %p89 = scmp.ne.s32.totalorder %s81, %s84
      %p90 = scmp.eq.s32.totalorder %s15, 0
      %p91 = por %p89, %p90
      %p92 = scmp.ne.s32.totalorder %s81, %s84
      %p93 = scmp.eq.s32.totalorder %s20, 3
      %p94 = por %p92, %p93
      %p95 = scmp.ne.s32.totalorder %s84, %s85
      %p96 = scmp.eq.s32.totalorder %s20, 0
      %p97 = por %p95, %p96
      %p98 = scmp.ne.s32.totalorder %s84, %s85
      %p99 = scmp.eq.s32.totalorder %s21, 3
      %p100 = por %p98, %p99
      %p102 = scmp.ne.s32.totalorder %s85, %s101
      %p103 = scmp.eq.s32.totalorder %s21, 0
      %p104 = por %p102, %p103
      %s105 = ssub.s32 %s22, %s34
      %p106 = scmp.eq.s32.totalorder %s105, 0
      %s108 = sadd.s32 %s107, 1
      %s109 = scalar_select %p106, %s107, %s108
      %p112 = pneg %p106
      %p113 = scmp.eq.s32.totalorder %s15, 3
      %p114 = por %p112, %p113
      %p115 = scmp.ne.s32.totalorder %s107, %s110
      %p116 = scmp.eq.s32.totalorder %s15, 0
      %p117 = por %p115, %p116
      %p118 = scmp.ne.s32.totalorder %s107, %s110
      %p119 = scmp.eq.s32.totalorder %s20, 3
      %p120 = por %p118, %p119
      %p121 = scmp.ne.s32.totalorder %s110, %s111
      %p122 = scmp.eq.s32.totalorder %s20, 0
      %p123 = por %p121, %p122
      %p124 = scmp.ne.s32.totalorder %s110, %s111
      %p125 = scmp.eq.s32.totalorder %s21, 3
      %p126 = por %p124, %p125
      %p128 = scmp.ne.s32.totalorder %s111, %s127
      %p129 = scmp.eq.s32.totalorder %s21, 0
      %p130 = por %p128, %p129
      %p131 = scmp.le.s32.totalorder 1, %s15
      %p132 = scmp.lt.s32.totalorder %s15, 5
      %p133 = pnand %p131, %p132
      %p134 = pneg %p133
      // Predicated region
      $region9: #{tpu_custom_call.1} parent=5 // pred_check
        _
      $region10: #{tpu_custom_call.1} parent=5 // pred_check_branch
        %136 = sbr.rel (%p133) target = $region12
      $region11: #{tpu_custom_call.1} parent=5 // pred_region
        %s137 = ssub.s32 %s15, 1
        // Predicated region
        $region13: #{tpu_custom_call.1} parent=11 // pred_check
          %p138 = pneg %p48
        $region14: #{tpu_custom_call.1} parent=11 // pred_check_branch
          %140 = sbr.rel (%p138) target = $region16
        $region15: #{tpu_custom_call.1} parent=11 // pred_region
          %s142 = ssub.s32 16, 16
          %143 = vsyncadd [#allocation6], %s142
          %s145 = sshll.u32 %s0, 4
          %s146 = int_to_ptr.vmem [resolvable:$true] %s145
          %148 = dma.vmem_to_smem %s146, 16, [#allocation3], [#allocation6]
        $region16: #{tpu_custom_call.1} parent=11 // pred_fallthru
          _
        // Predicated region
        $region17: #{tpu_custom_call.1} parent=11 // pred_check
          %p149 = pneg %p69
        $region18: #{tpu_custom_call.1} parent=11 // pred_check_branch
          %151 = sbr.rel (%p149) target = $region20
        $region19: #{tpu_custom_call.1} parent=11 // pred_region
          _
        $region20: #{tpu_custom_call.1} parent=11 // pred_fallthru
          _
      $region12: #{tpu_custom_call.1} parent=5 // pred_fallthru
        _
      %p152 = scmp.lt.s32.totalorder %s15, 4
      // Predicated region
      $region21: #{tpu_custom_call.1} parent=5 // pred_check
        %p153 = pneg %p152
      $region22: #{tpu_custom_call.1} parent=5 // pred_check_branch
        %155 = sbr.rel (%p153) target = $region24
      $region23: #{tpu_custom_call.1} parent=5 // pred_region
        // Predicated region
        $region25: #{tpu_custom_call.1} parent=23 // pred_check
          %p156 = pneg %p91
        $region26: #{tpu_custom_call.1} parent=23 // pred_check_branch
          %158 = sbr.rel (%p156) target = $region28
        $region27: #{tpu_custom_call.1} parent=23 // pred_region
          %s159 = sand.u32 %s81, 1
          %s160 = scalar_lea.sflag [#allocation4], %s159
          %s161 = sand.u32 %s81, 1
          %s162 = smul.addr %s161, 32
          %s163 = scalar_lea.vmem [#allocation7], %s162
          %s164 = smul.u32 2, %s23
          %s165 = smul.u32 2, %s22
          %s167 = ssub.s32 512, 512
          %168 = vsyncadd %s160, %s167
          %s169 = smul.addr %s164, 2
          %s170 = sadd.s32 %s165, %s169
          %s171 = smul.addr %s170, 128
          %s172 = scalar_lea.hbm %s2, %s171
          %s173 = sshll.u32 %s163, 4
          %s174 = int_to_ptr.vmem [resolvable:$true] %s173
          %179 = dma.hbm_to_vmem [thread:$0]  %s172, 512, %s174, %s160, 128, 128, 8
        $region28: #{tpu_custom_call.1} parent=23 // pred_fallthru
          _
      $region24: #{tpu_custom_call.1} parent=5 // pred_fallthru
        _
      %p180 = scmp.le.s32.totalorder 1, %s15
      %p181 = scmp.lt.s32.totalorder %s15, 5
      %p182 = pnand %p180, %p181
      %p183 = pneg %p182
      // Predicated region
      $region29: #{tpu_custom_call.1} parent=5 // pred_check
        _
      $region30: #{tpu_custom_call.1} parent=5 // pred_check_branch
        %185 = sbr.rel (%p182) target = $region32
      $region31: #{tpu_custom_call.1} parent=5 // pred_region
        %s186 = ssub.s32 %s15, 1
        // Predicated region
        $region33: #{tpu_custom_call.1} parent=31 // pred_check
          %p187 = pneg %p48
        $region34: #{tpu_custom_call.1} parent=31 // pred_check_branch
          %189 = sbr.rel (%p187) target = $region36
        $region35: #{tpu_custom_call.1} parent=31 // pred_region
          %190 = dma.done [#allocation6], 16
        $region36: #{tpu_custom_call.1} parent=31 // pred_fallthru
          _
        %s191 = sand.u32 %s84, 1
        %s192 = scalar_lea.sflag [#allocation4], %s191
        %s193 = sand.u32 %s84, 1
        %s194 = smul.addr %s193, 32
        %s195 = scalar_lea.vmem [#allocation7], %s194
        // Predicated region
        $region37: #{tpu_custom_call.1} parent=31 // pred_check
          %p196 = pneg %p97
        $region38: #{tpu_custom_call.1} parent=31 // pred_check_branch
          %198 = sbr.rel (%p196) target = $region40
        $region39: #{tpu_custom_call.1} parent=31 // pred_region
          %199 = dma.done %s192, 512
        $region40: #{tpu_custom_call.1} parent=31 // pred_fallthru
          _
        %200 = sfence
        %p201 = pneg %p48
        %p202 = pneg %p45
        %p203 = pneg %p69
        %p204 = pneg %p66
        %s205 = sand.u32 %s84, 1
        %s206 = scalar_lea.sflag [#allocation4], %s205
        %s207 = sand.u32 %s84, 1
        %s208 = smul.addr %s207, 32
        %s209 = scalar_lea.vmem [#allocation7], %s208
        %p210 = pneg %p97
        %p211 = pneg %p94
        %p212 = pneg %p123
        %p213 = pneg %p120
        %s214 = smul.u32 2, %s25
        %s215 = smul.u32 2, %s24
        %s216 = smul.u32 2, %s24
        %p217 = scmp.eq.s32.totalorder %s25, 0
        // Predicated region
        $region41: #{tpu_custom_call.1} parent=31 // pred_check
          %p218 = pneg %p217
        $region42: #{tpu_custom_call.1} parent=31 // pred_check_branch
          %220 = sbr.rel (%p218) target = $region44
        $region43: #{tpu_custom_call.1} parent=31 // pred_region
          %s221 = sld [smem:[#allocation2]]
          %v222 = vstv %s221
          %vm223 = vcmask 130048
          %224 = vst.msk [vmem:[#allocation8] sm:$0xff] %vm223, %v222
          %225 = vst.msk [vmem:[#allocation8 + $0x8] sm:$0xff] %vm223, %v222
        $region44: #{tpu_custom_call.1} parent=31 // pred_fallthru
          _
        %s226 = smul.u32 %s25, 2
        %s227 = sld [smem:[#allocation3 + %s226]]
        %v228 = vld [vmem:[%s195] sm:$0xff]
        %v229 = vld [vmem:[%s195 + $0x8] sm:$0xff]
        %v230 = vstv %s227
        %v231 = vmul.f32 %v230, %v228
        %v232 = vmul.f32 %v230, %v229
        %v233 = vadd.f32 %v231, 0.0
        %v234 = vadd.f32 %v232, 0.0
        %s235 = sadd.s32 %s226, 1
        %s236 = sld [smem:[#allocation3 + %s235]]
        %s237 = scalar_lea.vmem %s195, 16 [#allocation7]
        %v238 = vld [vmem:[%s237] sm:$0xff]
        %v239 = vld [vmem:[%s237 + $0x8] sm:$0xff]
        %v240 = vstv %s236
        %v241 = vmul.f32 %v240, %v238
        %v242 = vmul.f32 %v240, %v239
        %v243 = vadd.f32 %v233, %v241
        %v244 = vadd.f32 %v234, %v242
        %v245 = vld [vmem:[#allocation8] sm:$0xff]
        %v246 = vld [vmem:[#allocation8 + $0x8] sm:$0xff]
        %v247 = vadd.f32 %v245, %v243
        %v248 = vadd.f32 %v246, %v244
        %vm249 = vcmask 130048
        %250 = vst.msk [vmem:[#allocation8] sm:$0xff] %vm249, %v247
        %251 = vst.msk [vmem:[#allocation8 + $0x8] sm:$0xff] %vm249, %v248
        // Predicated region
        $region45: #{tpu_custom_call.1} parent=31 // pred_check
          %p252 = pneg %p120
        $region46: #{tpu_custom_call.1} parent=31 // pred_check_branch
          %254 = sbr.rel (%p252) target = $region48
        $region47: #{tpu_custom_call.1} parent=31 // pred_region
          %s255 = smul.u32 2, %s24
          %s257 = ssub.s32 256, 256
          %258 = vsyncadd [#allocation5], %s257
          %s259 = smul.addr %s255, 128
          %s260 = scalar_lea.hbm %s3, %s259
          %s261 = sshll.u32 [#allocation8], 4
          %s262 = int_to_ptr.vmem [resolvable:$true] %s261
          %267 = dma.vmem_to_hbm [thread:$0]  %s262, 256, %s260, [#allocation5], 128, 128, 8
        $region48: #{tpu_custom_call.1} parent=31 // pred_fallthru
          _
        // Predicated region
        $region49: #{tpu_custom_call.1} parent=31 // pred_check
          %p268 = pneg %p120
        $region50: #{tpu_custom_call.1} parent=31 // pred_check_branch
          %270 = sbr.rel (%p268) target = $region52
        $region51: #{tpu_custom_call.1} parent=31 // pred_region
          %271 = dma.done [#allocation5], 256
        $region52: #{tpu_custom_call.1} parent=31 // pred_fallthru
          _
      $region32: #{tpu_custom_call.1} parent=5 // pred_fallthru
        _
      %p272 = scmp.le.s32.totalorder 2, %s15
      // Predicated region
      $region53: #{tpu_custom_call.1} parent=5 // pred_check
        %p273 = pneg %p272
      $region54: #{tpu_custom_call.1} parent=5 // pred_check_branch
        %275 = sbr.rel (%p273) target = $region56
      $region55: #{tpu_custom_call.1} parent=5 // pred_region
        %s276 = ssub.s32 %s15, 2
      $region56: #{tpu_custom_call.1} parent=5 // pred_fallthru
        _
    $region6: #{tpu_custom_call.1} parent=1 // loop_footer
      %s19 = sadd.s32 1, %s15
    $region7: #{tpu_custom_call.1} parent=1 // loop_footer_branch
      %14 = sbr.rel target = $region3
    $region8: #{tpu_custom_call.1} parent=1 // loop_exit
      _
    %277 = vsyncpa [#allocation4], 1
    %s278 = scalar_lea.sflag [#allocation4], 1
    %279 = vsyncpa %s278, 1
    %280 = vsyncpa [#allocation5], 1
    %s281 = scalar_lea.sflag [#allocation5], 1
    %282 = vsyncpa %s281, 1
    %283 = vsyncpa [#allocation6], 1
    %s284 = scalar_lea.sflag [#allocation6], 1
    %285 = vsyncpa %s284, 1

</llo_original>
